<compile_context>
chip_gen: v5e
topology: v5e:2x2
jax: 0.10.0
libtpu: 0.0.40
codegen_flags: <defaults>
</compile_context>

<pallas_src>
import numpy as np
import jax
import jax.numpy as jnp
from jax.experimental import pallas as pl
from jax.experimental.pallas import tpu as pltpu


_SQRT_2_OVER_PI = 0.7978845608028654


def _gelu_tanh(x):
    # PyTorch nn.GELU(approximate='tanh') formula.
    # TODO(synk): PyTorch's default nn.GELU() is the exact erf form; use lax.erf
    # here if/when it lowers cleanly in Mosaic (difference is <~1e-3 per element).
    return 0.5 * x * (1.0 + jnp.tanh(_SQRT_2_OVER_PI * (x + 0.044715 * (x * x * x))))


def ffn_kernel(x_ref, w1_ref, b1_ref, w2_ref, b2_ref, o_ref):
    # x_ref: (tm, dim) token tile. Weights/biases are resident (same block every
    # grid step, so Pallas does not re-DMA them).
    x = x_ref[...]                                                 # native dtype

    # Linear(dim -> hidden), f32 accumulation on the MXU.
    h = jnp.dot(x, w1_ref[...], preferred_element_type=jnp.float32)
    h = h + b1_ref[...].astype(jnp.float32)                        # (tm, hidden) f32
    h = _gelu_tanh(h)
    # Dropout(p=0.0) -> identity in the forward pass.

    # Linear(hidden -> dim): feed the MXU in the input dtype, accumulate in f32.
    h = h.astype(x_ref.dtype)
    y = jnp.dot(h, w2_ref[...], preferred_element_type=jnp.float32)
    y = y + b2_ref[...].astype(jnp.float32)

    o_ref[...] = y.astype(o_ref.dtype)


def feed_forward(x, w1, b1, w2, b2, *, tm=None, vmem_limit_bytes=48 * 1024 * 1024):
    """FeedForward forward pass.

    x:  (..., dim)
    w1: (dim, hidden)   -- stored (in, out), i.e. the transpose of nn.Linear.weight
    b1: (hidden,)
    w2: (hidden, dim)
    b2: (dim,)
    """
    *lead, dim = x.shape
    hidden = w1.shape[1]
    assert w1.shape == (dim, hidden) and w2.shape == (hidden, dim)
    assert b1.shape == (hidden,) and b2.shape == (dim,)

    m = int(np.prod(lead)) if lead else 1
    x2 = x.reshape(m, dim)

    if tm is None:
        # Per-token-row working set (f32 accounting): double-buffered x + out
        # tiles plus the hidden activation temp.  Budget ~16 MiB so the fused
        # kernel keeps full double-buffering on every generation, including
        # v7x's 64 MiB physical VMEM with two TensorCores sharing the chip.
        row_bytes = 4 * (2 * dim + 2 * dim + hidden)
        tm = (16 * 1024 * 1024) // max(row_bytes, 1)
        tm = int(min(1024, max(8, tm)))

    # Sublane constraint: tile rows must be a multiple of 8.  Clamp tm to the
    # (8-rounded) token count, then pad M up to a multiple of tm so every block
    # is full-size (no masked partial stores).
    tm = max(8, (tm // 8) * 8)
    m_ceil8 = ((m + 7) // 8) * 8
    tm = min(tm, m_ceil8)
    m_pad = ((m + tm - 1) // tm) * tm
    if m_pad != m:
        x2 = jnp.pad(x2, ((0, m_pad - m), (0, 0)))

    grid = (m_pad // tm,)
    out = pl.pallas_call(
        ffn_kernel,
        out_shape=jax.ShapeDtypeStruct((m_pad, dim), x.dtype),
        grid_spec=pltpu.PrefetchScalarGridSpec(
            num_scalar_prefetch=0,
            grid=grid,
            in_specs=[
                pl.BlockSpec((tm, dim), lambda i: (i, 0)),       # streamed x tile
                pl.BlockSpec((dim, hidden), lambda i: (0, 0)),   # resident W1
                pl.BlockSpec((1, hidden), lambda i: (0, 0)),     # resident b1
                pl.BlockSpec((hidden, dim), lambda i: (0, 0)),   # resident W2
                pl.BlockSpec((1, dim), lambda i: (0, 0)),        # resident b2
            ],
            out_specs=pl.BlockSpec((tm, dim), lambda i: (i, 0)),  # lane-dense out
        ),
        compiler_params=pltpu.CompilerParams(
            dimension_semantics=("parallel",),
            vmem_limit_bytes=vmem_limit_bytes,
        ),
    )(x2, w1, b1.reshape(1, hidden), w2, b2.reshape(1, dim))

    if m_pad != m:
        out = out[:m]
    return out.reshape(*lead, dim)


def feed_forward_reference(x, w1, b1, w2, b2):
    """Pure-JAX reference matching the kernel (and the PyTorch forward with
    tanh-approximate GELU and p=0.0 dropout)."""
    h = x @ w1 + b1
    h = _gelu_tanh(h)
    return h @ w2 + b2


if __name__ == "__main__":
    # Small shapes consistent with FeedForward(dim, hidden_dim) applied to a
    # (batch, seq, dim) token stream.
    B, SEQ, DIM, HIDDEN = 2, 8, 32, 64

    key = jax.random.PRNGKey(0)
    kx, kw1, kb1, kw2, kb2 = jax.random.split(key, 5)
    x = jax.random.normal(kx, (B, SEQ, DIM), dtype=jnp.float32)
    # nn.Linear weights stored as (in, out) for row-vector matmuls.
    w1 = jax.random.normal(kw1, (DIM, HIDDEN), dtype=jnp.float32) * 0.1
    b1 = jax.random.normal(kb1, (HIDDEN,), dtype=jnp.float32) * 0.1
    w2 = jax.random.normal(kw2, (HIDDEN, DIM), dtype=jnp.float32) * 0.1
    b2 = jax.random.normal(kb2, (DIM,), dtype=jnp.float32) * 0.1

    out = feed_forward(x, w1, b1, w2, b2)
    out = jax.block_until_ready(out)

    ref = feed_forward_reference(x, w1, b1, w2, b2)
    assert out.shape == (B, SEQ, DIM)
    assert jnp.allclose(out, ref, atol=1e-4, rtol=1e-4), "mismatch vs reference"

    print("KERNEL_OK")
</pallas_src>

<mosaic_0001>
module attributes {stable_mosaic.version = 11 : i64} {
  func.func @ffn_kernel(%arg0: i32, %arg1: memref<16x32xf32, #tpu.memory_space<vmem>>, %arg2: memref<32x64xf32, #tpu.memory_space<vmem>>, %arg3: memref<1x64xf32, #tpu.memory_space<vmem>>, %arg4: memref<64x32xf32, #tpu.memory_space<vmem>>, %arg5: memref<1x32xf32, #tpu.memory_space<vmem>>, %arg6: memref<16x32xf32, #tpu.memory_space<vmem>>) attributes {dimension_semantics = [#tpu.dimension_semantics<parallel>], iteration_bounds = array<i64: 1>, scalar_prefetch = 0 : i64, scratch_operands = 0 : i64, tpu.core_type = #tpu.core_type<tc>, window_params = [{transform_indices = @transform_0, window_bounds = array<i64: 16, 32>}, {pipeline_mode = #tpu.pipeline_mode<synchronous>, transform_indices = @transform_1, window_bounds = array<i64: 32, 64>}, {pipeline_mode = #tpu.pipeline_mode<synchronous>, transform_indices = @transform_2, window_bounds = array<i64: 1, 64>}, {pipeline_mode = #tpu.pipeline_mode<synchronous>, transform_indices = @transform_3, window_bounds = array<i64: 64, 32>}, {pipeline_mode = #tpu.pipeline_mode<synchronous>, transform_indices = @transform_4, window_bounds = array<i64: 1, 32>}, {transform_indices = @transform_5, window_bounds = array<i64: 16, 32>}]} {
    %c0 = arith.constant 0 : index
    %c0_0 = arith.constant 0 : index
    %0 = vector.load %arg1[%c0, %c0_0] : memref<16x32xf32, #tpu.memory_space<vmem>>, vector<16x32xf32>
    %c0_1 = arith.constant 0 : index
    %c0_2 = arith.constant 0 : index
    %1 = vector.load %arg2[%c0_1, %c0_2] : memref<32x64xf32, #tpu.memory_space<vmem>>, vector<32x64xf32>
    %cst = arith.constant dense<0.000000e+00> : vector<16x64xf32>
    %2 = tpu.matmul %0, %1, %cst {dimension_numbers = #tpu.dot_dimension_numbers<[1], [0], [0], [1], [0, 0, 1, 1], [], []>} : vector<16x32xf32>, vector<32x64xf32>, vector<16x64xf32> -> vector<16x64xf32>
    %c0_3 = arith.constant 0 : index
    %c0_4 = arith.constant 0 : index
    %3 = vector.load %arg3[%c0_3, %c0_4] : memref<1x64xf32, #tpu.memory_space<vmem>>, vector<1x64xf32>
    %4 = vector.broadcast %3 : vector<1x64xf32> to vector<16x64xf32>
    %5 = arith.addf %2, %4 : vector<16x64xf32>
    %cst_5 = arith.constant 5.000000e-01 : f32
    %6 = vector.broadcast %cst_5 : f32 to vector<16x64xf32>
    %7 = arith.mulf %6, %5 : vector<16x64xf32>
    %8 = arith.mulf %5, %5 : vector<16x64xf32>
    %9 = arith.mulf %8, %5 : vector<16x64xf32>
    %cst_6 = arith.constant 4.471500e-02 : f32
    %10 = vector.broadcast %cst_6 : f32 to vector<16x64xf32>
    %11 = arith.mulf %10, %9 : vector<16x64xf32>
    %12 = arith.addf %5, %11 : vector<16x64xf32>
    %cst_7 = arith.constant 0.797884583 : f32
    %13 = vector.broadcast %cst_7 : f32 to vector<16x64xf32>
    %14 = arith.mulf %13, %12 : vector<16x64xf32>
    %15 = math.tanh %14 : vector<16x64xf32>
    %cst_8 = arith.constant 1.000000e+00 : f32
    %16 = vector.broadcast %cst_8 : f32 to vector<16x64xf32>
    %17 = arith.addf %16, %15 : vector<16x64xf32>
    %18 = arith.mulf %7, %17 : vector<16x64xf32>
    %c0_9 = arith.constant 0 : index
    %c0_10 = arith.constant 0 : index
    %19 = vector.load %arg4[%c0_9, %c0_10] : memref<64x32xf32, #tpu.memory_space<vmem>>, vector<64x32xf32>
    %cst_11 = arith.constant dense<0.000000e+00> : vector<16x32xf32>
    %20 = tpu.matmul %18, %19, %cst_11 {dimension_numbers = #tpu.dot_dimension_numbers<[1], [0], [0], [1], [0, 0, 1, 1], [], []>} : vector<16x64xf32>, vector<64x32xf32>, vector<16x32xf32> -> vector<16x32xf32>
    %c0_12 = arith.constant 0 : index
    %c0_13 = arith.constant 0 : index
    %21 = vector.load %arg5[%c0_12, %c0_13] : memref<1x32xf32, #tpu.memory_space<vmem>>, vector<1x32xf32>
    %22 = vector.broadcast %21 : vector<1x32xf32> to vector<16x32xf32>
    %23 = arith.addf %20, %22 : vector<16x32xf32>
    %c0_14 = arith.constant 0 : index
    %c0_15 = arith.constant 0 : index
    %24 = vector.load %arg6[%c0_14, %c0_15] : memref<16x32xf32, #tpu.memory_space<vmem>>, vector<16x32xf32>
    tpu.vector_store %arg6[%c0_14, %c0_15], %23 {strides = array<i32>} : memref<16x32xf32, #tpu.memory_space<vmem>>, vector<16x32xf32>,
    return
  }
  func.func @transform_0(%arg0: i32) -> (i32, i32) {
    %c0_i32 = arith.constant 0 : i32
    %c0_i32_0 = arith.constant 0 : i32
    return %arg0, %c0_i32 : i32, i32
  }
  func.func @transform_1(%arg0: i32) -> (i32, i32) {
    %c0_i32 = arith.constant 0 : i32
    %c0_i32_0 = arith.constant 0 : i32
    %c0_i32_1 = arith.constant 0 : i32
    return %c0_i32, %c0_i32_0 : i32, i32
  }
  func.func @transform_2(%arg0: i32) -> (i32, i32) {
    %c0_i32 = arith.constant 0 : i32
    %c0_i32_0 = arith.constant 0 : i32
    %c0_i32_1 = arith.constant 0 : i32
    return %c0_i32, %c0_i32_0 : i32, i32
  }
  func.func @transform_3(%arg0: i32) -> (i32, i32) {
    %c0_i32 = arith.constant 0 : i32
    %c0_i32_0 = arith.constant 0 : i32
    %c0_i32_1 = arith.constant 0 : i32
    return %c0_i32, %c0_i32_0 : i32, i32
  }
  func.func @transform_4(%arg0: i32) -> (i32, i32) {
    %c0_i32 = arith.constant 0 : i32
    %c0_i32_0 = arith.constant 0 : i32
    %c0_i32_1 = arith.constant 0 : i32
    return %c0_i32, %c0_i32_0 : i32, i32
  }
  func.func @transform_5(%arg0: i32) -> (i32, i32) {
    %c0_i32 = arith.constant 0 : i32
    %c0_i32_0 = arith.constant 0 : i32
    return %arg0, %c0_i32 : i32, i32
  }
}

</mosaic_0001>

<llo_original>
// kernel: tpu_custom_call.1
$region0: #{tpu_custom_call.1}
  #allocation0 [shape = 'u32[]', space=smem, size = 0x4, offset = 0x4, fixed_abs, tag = 'smem constant byte address 0x4 - core index']
  #allocation1 [shape = 'u32[72,128]{1,0:T(1,128)}', space=vmem, size = 0x9000, scoped, tag = 'internal scratch']
  %s0 = inlined_call_operand.vmem [shape: f32[16,32], index: 0, kind: input, shape index: {}]
  %s1 = inlined_call_operand.vmem [shape: f32[32,64], index: 1, kind: input, shape index: {}]
  %s2 = inlined_call_operand.vmem [shape: f32[1,64], index: 2, kind: input, shape index: {}]
  %s3 = inlined_call_operand.vmem [shape: f32[64,32], index: 3, kind: input, shape index: {}]
  %s4 = inlined_call_operand.vmem [shape: f32[1,32], index: 4, kind: input, shape index: {}]
  %s5 = inlined_call_operand.hbm [shape: f32[16,32], index: 5, kind: output, shape index: {}]
  %s6 = sld [smem:[#allocation0]]
  $region30: #{tpu_custom_call.1} parent=0
    _
  %s8 = ssub.s32 1, %s6
  %s9 = scalar_select 0, %s8, %s6
  $region1: #{tpu_custom_call.1} parent=0
    #allocation2 [shape = 'u8[8192]{0}', space=vmem, size = 0x2000, scoped, tag = 'output window, operand 0, single buffered']
    #allocation3 [shape = 's32[1]{0}', space=sflag, size = 0x4, scoped, tag = 'scoped memory for tpu_custom_call.1']
    %10 = vsyncpa [#allocation3], 0
    // Predicated region
    $region2: #{tpu_custom_call.1} parent=1 // pred_check
      _
    $region3: #{tpu_custom_call.1} parent=1 // pred_check_branch
      %12 = sbr.rel (0) target = $region5
    $region4: #{tpu_custom_call.1} parent=1 // pred_region
      _
    $region5: #{tpu_custom_call.1} parent=1 // pred_fallthru
      _
    // Predicated region
    $region6: #{tpu_custom_call.1} parent=1 // pred_check
      _
    $region7: #{tpu_custom_call.1} parent=1 // pred_check_branch
      %14 = sbr.rel (0) target = $region9
    $region8: #{tpu_custom_call.1} parent=1 // pred_region
      _
    $region9: #{tpu_custom_call.1} parent=1 // pred_fallthru
      _
    // Predicated region
    $region10: #{tpu_custom_call.1} parent=1 // pred_check
      _
    $region11: #{tpu_custom_call.1} parent=1 // pred_check_branch
      %16 = sbr.rel (0) target = $region13
    $region12: #{tpu_custom_call.1} parent=1 // pred_region
      _
    $region13: #{tpu_custom_call.1} parent=1 // pred_fallthru
      _
    // Predicated region
    $region14: #{tpu_custom_call.1} parent=1 // pred_check
      _
    $region15: #{tpu_custom_call.1} parent=1 // pred_check_branch
      %18 = sbr.rel (0) target = $region17
    $region16: #{tpu_custom_call.1} parent=1 // pred_region
      _
    $region17: #{tpu_custom_call.1} parent=1 // pred_fallthru
      _
    // Predicated region
    $region18: #{tpu_custom_call.1} parent=1 // pred_check
      _
    $region19: #{tpu_custom_call.1} parent=1 // pred_check_branch
      %20 = sbr.rel (0) target = $region21
    $region20: #{tpu_custom_call.1} parent=1 // pred_region
      _
    $region21: #{tpu_custom_call.1} parent=1 // pred_fallthru
      _
    %v21 = vld [vmem:[%s0] sm:$0xff]
    %v22 = vld [vmem:[%s0 + $0x8] sm:$0xff]
    %v23 = vld [vmem:[%s1] sm:$0xff]
    %v24 = vld [vmem:[%s1 + $0x8] sm:$0xff]
    %v25 = vld [vmem:[%s1 + $0x10] sm:$0xff]
    %v26 = vld [vmem:[%s1 + $0x18] sm:$0xff]
    %v27 = vld [vmem:[%s2] sm:$0x1]
    %v29 = vperm.slane %v27, 0
    %vm31 = vcmask 261120
    %v33 = vsel %vm31, %v21, 0
    %v36 = vsel %vm31, %v22, 0
    %38 = vmatpush.msra.mxu0 0.0
    %39 = vmatpush.msra.mxu0 0.0
    %40 = vmatpush.msra.mxu0 0.0
    %41 = vmatpush.msra.mxu0 0.0
    %42 = vmatpush.msra.mxu0 0.0
    %43 = vmatpush.msra.mxu0 0.0
    %44 = vmatpush.msra.mxu0 0.0
    %45 = vmatpush.msra.mxu0 0.0
    %46 = vmatpush.msra.mxu0 0.0
    %47 = vmatpush.msra.mxu0 0.0
    %48 = vmatpush.msra.mxu0 0.0
    %49 = vmatpush.msra.mxu0 0.0
    %50 = vmatpush.msra.mxu0 %v26
    %51 = vmatpush.msra.mxu0 %v25
    %52 = vmatpush.msra.mxu0 %v24
    %53 = vmatpush.msra.mxu0 %v23
    %54 = vmatmul.f32.gmra.mxu0 %v33
    %v55 = vpop.f32.mrf.mxu0
    %v56 = vadd.f32 %v29, %v55
    %57 = vmatmul.f32.gmra.mxu0 %v36
    %v58 = vpop.f32.mrf.mxu0
    %v59 = vadd.f32 %v29, %v58
    %60 = vdwg.mxu0
    %v61 = vmul.f32 %v56, 0.5
    %v62 = vmul.f32 %v59, 0.5
    %v63 = vmul.f32 %v56, %v56
    %v64 = vmul.f32 %v59, %v59
    %v65 = vmul.f32 %v63, %v56
    %v66 = vmul.f32 %v64, %v59
    %v67 = vmul.f32 %v65, 0.044715
    %v68 = vmul.f32 %v66, 0.044715
    %v69 = vadd.f32 %v56, %v67
    %v70 = vadd.f32 %v59, %v68
    %v71 = vmul.f32 %v69, 0.7978846
    %v72 = vmul.f32 %v70, 0.7978846
    %v73 = vtanh.pop %v71
    %v74 = vtanh.pop %v72
    %v75 = vadd.f32 %v73, 1.0
    %v76 = vadd.f32 %v74, 1.0
    %v77 = vmul.f32 %v61, %v75
    %v78 = vmul.f32 %v62, %v76
    %v79 = vld [vmem:[%s3] sm:$0xff]
    %v80 = vld [vmem:[%s3 + $0x8] sm:$0xff]
    %v81 = vld [vmem:[%s3 + $0x10] sm:$0xff]
    %v82 = vld [vmem:[%s3 + $0x18] sm:$0xff]
    %v83 = vld [vmem:[%s3 + $0x20] sm:$0xff]
    %v84 = vld [vmem:[%s3 + $0x28] sm:$0xff]
    %v85 = vld [vmem:[%s3 + $0x30] sm:$0xff]
    %v86 = vld [vmem:[%s3 + $0x38] sm:$0xff]
    %v87 = vld [vmem:[%s4] sm:$0x1]
    %v89 = vperm.slane %v87, 0
    %vm91 = vcmask 523264
    %v93 = vsel %vm91, %v77, 0
    %v96 = vsel %vm91, %v78, 0
    %98 = vmatpush.msra.mxu0 0.0
    %99 = vmatpush.msra.mxu0 0.0
    %100 = vmatpush.msra.mxu0 0.0
    %101 = vmatpush.msra.mxu0 0.0
    %102 = vmatpush.msra.mxu0 0.0
    %103 = vmatpush.msra.mxu0 0.0
    %104 = vmatpush.msra.mxu0 0.0
    %105 = vmatpush.msra.mxu0 0.0
    %106 = vmatpush.msra.mxu0 %v86
    %107 = vmatpush.msra.mxu0 %v85
    %108 = vmatpush.msra.mxu0 %v84
    %109 = vmatpush.msra.mxu0 %v83
    %110 = vmatpush.msra.mxu0 %v82
    %111 = vmatpush.msra.mxu0 %v81
    %112 = vmatpush.msra.mxu0 %v80
    %113 = vmatpush.msra.mxu0 %v79
    %114 = vmatmul.f32.gmra.mxu0 %v93
    %v115 = vpop.f32.mrf.mxu0
    %v116 = vadd.f32 %v89, %v115
    %117 = vmatmul.f32.gmra.mxu0 %v96
    %v118 = vpop.f32.mrf.mxu0
    %v119 = vadd.f32 %v89, %v118
    %120 = vdwg.mxu0
    %121 = vst.msk [vmem:[#allocation2] sm:$0xff] %vm31, %v116
    %122 = vst.msk [vmem:[#allocation2 + $0x8] sm:$0xff] %vm31, %v119
    // Predicated region
    $region22: #{tpu_custom_call.1} parent=1 // pred_check
      _
    $region23: #{tpu_custom_call.1} parent=1 // pred_check_branch
      %124 = sbr.rel (0) target = $region25
    $region24: #{tpu_custom_call.1} parent=1 // pred_region
      %126 = vsyncadd [#allocation3], 0
      %s127 = sshll.u32 [#allocation2], 4
      %s128 = int_to_ptr.vmem [resolvable:$true] %s127
      %s129 = sshll.u32 %s5, 4
      %s130 = int_to_ptr.hbm [resolvable:$true] %s129
      %135 = dma.vmem_to_hbm [thread:$0]  %s128, 256, %s130, [#allocation3], 128, 128, 8
    $region25: #{tpu_custom_call.1} parent=1 // pred_fallthru
      _
    // Predicated region
    $region26: #{tpu_custom_call.1} parent=1 // pred_check
      _
    $region27: #{tpu_custom_call.1} parent=1 // pred_check_branch
      %137 = sbr.rel (0) target = $region29
    $region28: #{tpu_custom_call.1} parent=1 // pred_region
      %139 = dma.done [#allocation3], 256
    $region29: #{tpu_custom_call.1} parent=1 // pred_fallthru
      _
    %140 = vsyncpa [#allocation3], 1

</llo_original>
